<compile_context>
chip_gen: v6e
topology: v6e:2x2x1
jax: 0.10.0
libtpu: 0.0.40
codegen_flags: <defaults>
</compile_context>

<pallas_src>
import jax
import jax.numpy as jnp
from jax.experimental import pallas as pl
from jax.experimental.pallas import tpu as pltpu

_LANE = 128
_MAX_WIDTH = 4096                     # lane-dense row width cap (elements)
_MAX_BLOCK_BYTES = 4 * 1024 * 1024    # ~4 MiB per-array block target (review: 4-6 MiB)
_VMEM_LIMIT = 48 * 1024 * 1024        # 3 arrays x 2 buffers x 4 MiB = 24 MiB << 48 MiB


def _sublane_multiple(dtype) -> int:
    """Packed-sublane multiple: f32 -> 8, bf16/f16 -> 16, int8/fp8 -> 32."""
    return max(8, 32 // jnp.dtype(dtype).itemsize)


def _add_kernel(x_ref, f_ref, o_ref):
    # One wide VPU add per grid step; any dtype cast is free work hidden under DMA.
    o_ref[...] = x_ref[...].astype(o_ref.dtype) + f_ref[...].astype(o_ref.dtype)


def _pick_width(total, sub):
    """Largest multiple of 128 (<= _MAX_WIDTH) dividing `total`, preferring one that
    leaves at least `sub` rows so blocks are sublane-dense.  None if no multiple of
    128 divides `total`."""
    cap = min(_MAX_WIDTH, total)
    cap -= cap % _LANE
    shallow = None
    for cw in range(cap, 0, -_LANE):
        if total % cw == 0:
            if total // cw >= sub:
                return cw
            if shallow is None:
                shallow = cw
    return shallow


def _pick_row_tile(R, sub, row_set_bytes):
    """Row tile tm: multiple of `sub` (or the full R when R <= sub), per-step working
    set (all 3 arrays together) under budget, and >= 2 grid steps when R allows it so
    both v7x TensorCores get work."""
    if R <= sub:
        return R
    budget_rows = max(sub, (3 * _MAX_BLOCK_BYTES) // row_set_bytes)
    tm = max(sub, (min(budget_rows, R) // sub) * sub)
    if tm >= R and R >= 2 * sub:
        # Would be a single grid step: split into two so the grid can shard across
        # the two TensorCores on v7x and DMA/compute/writeback can overlap.
        half = (R + 1) // 2
        tm = ((half + sub - 1) // sub) * sub
        tm = min(tm, (R // sub) * sub)
    return tm


def add_pallas(x, layer_feature, *, min_pallas_bytes=1 << 18):
    """x, layer_feature: same shape (e.g. NCHW). Returns x + layer_feature."""
    assert x.shape == layer_feature.shape, "Add expects matching shapes"
    out_dtype = jnp.promote_types(x.dtype, layer_feature.dtype)

    total = x.size
    isz_x = jnp.dtype(x.dtype).itemsize
    isz_f = jnp.dtype(layer_feature.dtype).itemsize
    isz_o = jnp.dtype(out_dtype).itemsize

    if total == 0 or total * isz_o < min_pallas_bytes:
        # Tiny tensors: pallas_call fixed overhead dwarfs the work.
        return x + layer_feature

    sub = max(_sublane_multiple(x.dtype),
              _sublane_multiple(layer_feature.dtype),
              _sublane_multiple(out_dtype))

    cw = _pick_width(total, sub)
    if cw is None:
        # No multiple-of-128 factor: XLA's fused add already runs at the HBM
        # roofline; any pad / slice / stitch scheme only adds extra HBM passes.
        return x + layer_feature

    R = total // cw
    row_set_bytes = cw * (isz_x + isz_f + isz_o)
    tm = _pick_row_tile(R, sub, row_set_bytes)
    grid = (pl.cdiv(R, tm),)

    x2 = x.reshape(R, cw)
    f2 = layer_feature.reshape(R, cw)

    out2 = pl.pallas_call(
        _add_kernel,
        out_shape=jax.ShapeDtypeStruct((R, cw), out_dtype),
        grid_spec=pltpu.PrefetchScalarGridSpec(
            num_scalar_prefetch=0,
            grid=grid,
            in_specs=[
                pl.BlockSpec((tm, cw), lambda i: (i, 0)),
                pl.BlockSpec((tm, cw), lambda i: (i, 0)),
            ],
            out_specs=pl.BlockSpec((tm, cw), lambda i: (i, 0)),
        ),
        compiler_params=pltpu.CompilerParams(
            dimension_semantics=("parallel",),
            vmem_limit_bytes=_VMEM_LIMIT,
        ),
    )(x2, f2)
    return out2.reshape(x.shape)


if __name__ == "__main__":
    key = jax.random.PRNGKey(0)
    kx, kf = jax.random.split(key)

    # Small NCHW shapes consistent with the module's forward.
    N, C, H, W = 2, 4, 16, 16
    x = jax.random.normal(kx, (N, C, H, W), dtype=jnp.float32)
    # Deterministic "layer_feature" parameter (same shape as x in the module's use).
    layer_feature = jax.random.normal(kf, (N, C, H, W), dtype=jnp.float32)

    # Force the Pallas path (bypass the tiny-input shortcut) so the kernel runs.
    out = add_pallas(x, layer_feature, min_pallas_bytes=0)
    jax.block_until_ready(out)
    ref = x + layer_feature
    assert out.shape == ref.shape and out.dtype == ref.dtype
    assert jnp.allclose(out, ref, atol=1e-6), "mismatch vs reference (f32)"

    # Mixed-dtype case: layer_feature stays bf16, cast happens inside the kernel.
    lf_bf16 = layer_feature.astype(jnp.bfloat16)
    out_mixed = add_pallas(x, lf_bf16, min_pallas_bytes=0)
    jax.block_until_ready(out_mixed)
    ref_mixed = x + lf_bf16
    assert out_mixed.shape == ref_mixed.shape and out_mixed.dtype == ref_mixed.dtype
    assert jnp.allclose(out_mixed, ref_mixed, atol=1e-6), "mismatch vs reference (mixed)"

    print("KERNEL_OK")
</pallas_src>

<mosaic_0001>
module attributes {stable_mosaic.version = 11 : i64} {
  func.func @_add_kernel(%arg0: i32, %arg1: memref<8x256xf32, #tpu.memory_space<vmem>>, %arg2: memref<8x256xf32, #tpu.memory_space<vmem>>, %arg3: memref<8x256xf32, #tpu.memory_space<vmem>>) attributes {dimension_semantics = [#tpu.dimension_semantics<parallel>], iteration_bounds = array<i64: 1>, scalar_prefetch = 0 : i64, scratch_operands = 0 : i64, tpu.core_type = #tpu.core_type<tc>, window_params = [{transform_indices = @transform_0, window_bounds = array<i64: 8, 256>}, {transform_indices = @transform_1, window_bounds = array<i64: 8, 256>}, {transform_indices = @transform_2, window_bounds = array<i64: 8, 256>}]} {
    %c0 = arith.constant 0 : index
    %c0_0 = arith.constant 0 : index
    %0 = vector.load %arg1[%c0, %c0_0] : memref<8x256xf32, #tpu.memory_space<vmem>>, vector<8x256xf32>
    %c0_1 = arith.constant 0 : index
    %c0_2 = arith.constant 0 : index
    %1 = vector.load %arg2[%c0_1, %c0_2] : memref<8x256xf32, #tpu.memory_space<vmem>>, vector<8x256xf32>
    %2 = arith.addf %0, %1 : vector<8x256xf32>
    %c0_3 = arith.constant 0 : index
    %c0_4 = arith.constant 0 : index
    %3 = vector.load %arg3[%c0_3, %c0_4] : memref<8x256xf32, #tpu.memory_space<vmem>>, vector<8x256xf32>
    tpu.vector_store %arg3[%c0_3, %c0_4], %2 {strides = array<i32>} : memref<8x256xf32, #tpu.memory_space<vmem>>, vector<8x256xf32>,
    return
  }
  func.func @transform_0(%arg0: i32) -> (i32, i32) {
    %c0_i32 = arith.constant 0 : i32
    %c0_i32_0 = arith.constant 0 : i32
    return %arg0, %c0_i32 : i32, i32
  }
  func.func @transform_1(%arg0: i32) -> (i32, i32) {
    %c0_i32 = arith.constant 0 : i32
    %c0_i32_0 = arith.constant 0 : i32
    return %arg0, %c0_i32 : i32, i32
  }
  func.func @transform_2(%arg0: i32) -> (i32, i32) {
    %c0_i32 = arith.constant 0 : i32
    %c0_i32_0 = arith.constant 0 : i32
    return %arg0, %c0_i32 : i32, i32
  }
}

</mosaic_0001>

<llo_original>
// kernel: tpu_custom_call.1
$region0: #{tpu_custom_call.1}
  #allocation0 [shape = 'u32[]', space=smem, size = 0x4, offset = 0x4, fixed_abs, tag = 'smem constant byte address 0x4 - core index']
  #allocation1 [shape = 'u32[144,128]{1,0:T(1,128)}', space=vmem, size = 0x12000, scoped, tag = 'internal scratch']
  %s0 = inlined_call_operand.hbm [shape: f32[8,256], index: 0, kind: input, shape index: {}]
  %s1 = inlined_call_operand.hbm [shape: f32[8,256], index: 1, kind: input, shape index: {}]
  %s2 = inlined_call_operand.hbm [shape: f32[8,256], index: 2, kind: output, shape index: {}]
  %s3 = sld [smem:[#allocation0]]
  $region26: #{tpu_custom_call.1} parent=0
    _
  %s5 = ssub.s32 1, %s3
  %s6 = scalar_select 0, %s5, %s3
  $region1: #{tpu_custom_call.1} parent=0
    #allocation2 [shape = 'u8[8192]{0}', space=vmem, size = 0x2000, scoped, tag = 'input window, operand 0, single buffered']
    #allocation3 [shape = 's32[1]{0}', space=sflag, size = 0x4, scoped, tag = 'scoped memory for tpu_custom_call.1']
    #allocation4 [shape = 's32[1]{0}', space=sflag, size = 0x4, scoped, tag = 'scoped memory for tpu_custom_call.1']
    #allocation5 [shape = 'u8[8192]{0}', space=vmem, size = 0x2000, scoped, tag = 'input window, operand 1, single buffered']
    #allocation6 [shape = 's32[1]{0}', space=sflag, size = 0x4, scoped, tag = 'scoped memory for tpu_custom_call.1']
    #allocation7 [shape = 'u8[8192]{0}', space=vmem, size = 0x2000, scoped, tag = 'output window, operand 0, single buffered']
    %7 = vsyncpa [#allocation3], 0
    %8 = vsyncpa [#allocation6], 0
    %9 = vsyncpa [#allocation4], 0
    // Predicated region
    $region2: #{tpu_custom_call.1} parent=1 // pred_check
      _
    $region3: #{tpu_custom_call.1} parent=1 // pred_check_branch
      %11 = sbr.rel (0) target = $region5
    $region4: #{tpu_custom_call.1} parent=1 // pred_region
      %s13 = ssub.s32 256, 256
      %14 = vsyncadd [#allocation3], %s13
      %s16 = sshll.u32 [#allocation2], 4
      %s17 = int_to_ptr.vmem [resolvable:$true] %s16
      %19 = dma.hbm_to_vmem [thread:$0]  %s0, 256, %s17, [#allocation3]
    $region5: #{tpu_custom_call.1} parent=1 // pred_fallthru
      _
    // Predicated region
    $region6: #{tpu_custom_call.1} parent=1 // pred_check
      _
    $region7: #{tpu_custom_call.1} parent=1 // pred_check_branch
      %21 = sbr.rel (0) target = $region9
    $region8: #{tpu_custom_call.1} parent=1 // pred_region
      %s23 = ssub.s32 256, 256
      %24 = vsyncadd [#allocation6], %s23
      %s26 = sshll.u32 [#allocation5], 4
      %s27 = int_to_ptr.vmem [resolvable:$true] %s26
      %29 = dma.hbm_to_vmem [thread:$0]  %s1, 256, %s27, [#allocation6]
    $region9: #{tpu_custom_call.1} parent=1 // pred_fallthru
      _
    // Predicated region
    $region10: #{tpu_custom_call.1} parent=1 // pred_check
      _
    $region11: #{tpu_custom_call.1} parent=1 // pred_check_branch
      %31 = sbr.rel (0) target = $region13
    $region12: #{tpu_custom_call.1} parent=1 // pred_region
      %32 = dma.done [#allocation3], 256
    $region13: #{tpu_custom_call.1} parent=1 // pred_fallthru
      _
    // Predicated region
    $region14: #{tpu_custom_call.1} parent=1 // pred_check
      _
    $region15: #{tpu_custom_call.1} parent=1 // pred_check_branch
      %34 = sbr.rel (0) target = $region17
    $region16: #{tpu_custom_call.1} parent=1 // pred_region
      %35 = dma.done [#allocation6], 256
    $region17: #{tpu_custom_call.1} parent=1 // pred_fallthru
      _
    %v36 = vld [vmem:[#allocation2] sm:$0xff]
    %v37 = vld [vmem:[#allocation2 + $0x8] sm:$0xff]
    %v38 = vld [vmem:[#allocation5] sm:$0xff]
    %v39 = vld [vmem:[#allocation5 + $0x8] sm:$0xff]
    %v40 = vadd.f32 %v36, %v38
    %v41 = vadd.f32 %v37, %v39
    %42 = vst [vmem:[#allocation7] sm:$0xff] %v40
    %43 = vst [vmem:[#allocation7 + $0x8] sm:$0xff] %v41
    // Predicated region
    $region18: #{tpu_custom_call.1} parent=1 // pred_check
      _
    $region19: #{tpu_custom_call.1} parent=1 // pred_check_branch
      %45 = sbr.rel (0) target = $region21
    $region20: #{tpu_custom_call.1} parent=1 // pred_region
      %s47 = ssub.s32 256, 256
      %48 = vsyncadd [#allocation4], %s47
      %s50 = sshll.u32 [#allocation7], 4
      %s51 = int_to_ptr.vmem [resolvable:$true] %s50
      %53 = dma.vmem_to_hbm [thread:$0]  %s51, 256, %s2, [#allocation4]
    $region21: #{tpu_custom_call.1} parent=1 // pred_fallthru
      _
    // Predicated region
    $region22: #{tpu_custom_call.1} parent=1 // pred_check
      _
    $region23: #{tpu_custom_call.1} parent=1 // pred_check_branch
      %55 = sbr.rel (0) target = $region25
    $region24: #{tpu_custom_call.1} parent=1 // pred_region
      %56 = dma.done [#allocation4], 256
    $region25: #{tpu_custom_call.1} parent=1 // pred_fallthru
      _
    %57 = vsyncpa [#allocation3], 1
    %58 = vsyncpa [#allocation6], 1
    %59 = vsyncpa [#allocation4], 1

</llo_original>
